<compile_context>
chip_gen: v6e
topology: v6e:2x2x1
jax: 0.10.0
libtpu: 0.0.40
codegen_flags: <defaults>
</compile_context>

<pallas_src>
import numpy as np
import jax
import jax.numpy as jnp
from jax.experimental import pallas as pl
from jax.experimental.pallas import tpu as pltpu

POOL = 32                  # roi_align output_size
SUB, LANE = 8, 128         # one (8,128) f32 vreg tile holds a whole 32x32 pooled window
PP = POOL * POOL           # 1024 == SUB * LANE
BN_EPS = 1e-5              # nn.BatchNorm2d default eps


def _mim_kernel(w1_ref, b1_ref, w2_ref, b2_ref, roi_ref, out_ref):
    """One block of R ROIs per grid step.

    roi_ref : VMEM [R, C_in, 8, 128]   (pooled 32x32 window = one full vreg tile / channel)
    out_ref : VMEM [R, C_out, 8, 128]  (torch (k, c, ph, pw) layout, single full store)
    w1/b1   : SMEM folded conv1+BN weights  [C_mid, C_in] / [C_mid]
    w2/b2   : SMEM conv2 weights            [C_out, C_mid] / [C_out]
    """
    c_mid, c_in = w1_ref.shape
    c_out = w2_ref.shape[0]

    roi = roi_ref[...]                                    # [R, C_in, 8, 128]
    xs = [roi[:, c] for c in range(c_in)]                 # full-vreg [R, 8, 128] slabs

    # conv1 (BN folded in) + ReLU — tiny channel counts: unrolled VPU broadcast-FMAs,
    # weights read as scalars from SMEM.
    h = []
    for m in range(c_mid):
        acc = xs[0] * w1_ref[m, 0]
        for c in range(1, c_in):
            acc = acc + xs[c] * w1_ref[m, c]
        h.append(jnp.maximum(acc + b1_ref[m], 0.0))       # [R, 8, 128]

    # conv2 — accumulate every output channel, then one unmasked full-block store.
    outs = []
    for o in range(c_out):
        acc = h[0] * w2_ref[o, 0]
        for m in range(1, c_mid):
            acc = acc + h[m] * w2_ref[o, m]
        outs.append(acc + b2_ref[o])                      # [R, 8, 128]
    out_ref[...] = jnp.stack(outs, axis=1)                # [R, C_out, 8, 128]


def _roi_align_slab(x_nchw, boxes, pooled):
    """torchvision roi_align (spatial_scale=1.0, aligned=False, 1 adaptive sample/bin).

    Gathers straight from the NCHW feature map (flat (B*C, H*W) broadcasted gather; no
    NHWC transpose, no per-ROI feature-map duplication) and fuses the 4-corner weighted
    combine, returning the slab in the kernel's (K, C, pooled, pooled) layout.
    """
    B, C, H, W = x_nchw.shape
    bidx = boxes[:, 0].astype(jnp.int32)
    x1, y1, x2, y2 = boxes[:, 1], boxes[:, 2], boxes[:, 3], boxes[:, 4]

    roi_w = jnp.maximum(x2 - x1, 1.0)                     # aligned=False clamps to >= 1
    roi_h = jnp.maximum(y2 - y1, 1.0)
    bin_w = roi_w / pooled
    bin_h = roi_h / pooled

    p = jnp.arange(pooled, dtype=jnp.float32) + 0.5
    ys = y1[:, None] + p[None, :] * bin_h[:, None]        # [K, P]
    xs = x1[:, None] + p[None, :] * bin_w[:, None]        # [K, P]

    def axis_setup(v, size):
        valid = (v >= -1.0) & (v <= float(size))
        v = jnp.maximum(v, 0.0)
        lo = jnp.floor(v).astype(jnp.int32)
        hi_clip = lo >= size - 1
        lo = jnp.where(hi_clip, size - 1, lo)
        hi = jnp.where(hi_clip, size - 1, lo + 1)
        v = jnp.where(hi_clip, lo.astype(jnp.float32), v)
        frac = v - lo.astype(jnp.float32)
        return lo, hi, frac, valid

    yl, yh, ly, vy = axis_setup(ys, H)
    xl, xh, lx, vx = axis_setup(xs, W)
    hy, hx = 1.0 - ly, 1.0 - lx

    valid = (vy[:, :, None] & vx[:, None, :]).astype(jnp.float32)   # [K, P, P]
    w00 = hy[:, :, None] * hx[:, None, :] * valid
    w01 = hy[:, :, None] * lx[:, None, :] * valid
    w10 = ly[:, :, None] * hx[:, None, :] * valid
    w11 = ly[:, :, None] * lx[:, None, :] * valid

    # Flat gather from the native NCHW layout: row = b*C + c, col = y*W + x.
    x_flat = x_nchw.reshape(B * C, H * W)
    crow = (bidx[:, None] * C
            + jnp.arange(C, dtype=jnp.int32)[None, :])[:, :, None, None]   # [K, C, 1, 1]

    def corner(yi, xi):
        col = (yi[:, :, None] * W + xi[:, None, :])[:, None, :, :]         # [K, 1, P, P]
        return x_flat[crow, col]                                           # [K, C, P, P]

    return (w00[:, None] * corner(yl, xl) + w01[:, None] * corner(yl, xh)
            + w10[:, None] * corner(yh, xl) + w11[:, None] * corner(yh, xh))


def _rois_per_block(K, c_in, c_out):
    """ROIs per grid step: amortize per-step overhead, stay well inside VMEM, keep the
    grid length >= 2 so the 'parallel' axis balances across v7x's two TensorCores."""
    bytes_per_roi = (c_in + c_out) * PP * 4
    target = max(1, (512 * 1024) // bytes_per_roi)                   # ~0.5 MiB per step
    vmem_cap = max(1, (8 * 1024 * 1024) // (2 * bytes_per_roi))      # 2x-buffered << 32 MiB
    r = min(target, vmem_cap, 64)
    if K >= 2:
        r = min(r, -(-K // 2))                                       # grid >= 2
    return max(1, min(r, K))


def mim_forward(x_nchw, ratio_boxs, params, pooled=POOL):
    """MIM forward. x_nchw: [B, C_in, H, W]; ratio_boxs: [K, 5] (batch_idx, x1, y1, x2, y2).
    Returns [K, C_out * pooled * pooled]."""
    assert pooled * pooled == SUB * LANE
    W1, b1, gamma, beta, W2, b2 = params
    C_in, C_mid = W1.shape
    C_out = W2.shape[1]
    K = ratio_boxs.shape[0]
    pp = pooled * pooled

    roi = _roi_align_slab(x_nchw, ratio_boxs, pooled)     # [K, C_in, P, P]

    # --- BatchNorm2d training-mode batch stats over the FULL (K, P, P) batch, derived
    #     from roi moments (centered covariance == two-pass form, avoids E[x^2]-E[x]^2
    #     cancellation) and folded into conv1 so the kernel tiles the ROI axis freely.
    n = K * pp
    mu = jnp.mean(roi, axis=(0, 2, 3))                                   # [C_in]
    cen = roi - mu[None, :, None, None]
    cov = jnp.einsum('kcpq,kdpq->cd', cen, cen,
                     preferred_element_type=jnp.float32) / n             # [C_in, C_in]
    b1_flat = b1.reshape(-1)
    mean_h = jnp.dot(W1.T, mu) + b1_flat                                 # [C_mid]
    var_h = jnp.einsum('cm,cd,dm->m', W1, cov, W1)                       # biased, as torch
    scale = gamma.reshape(-1) * jax.lax.rsqrt(var_h + BN_EPS)            # gamma / sigma
    W1f = (W1.T * scale[:, None]).astype(jnp.float32)                    # [C_mid, C_in]
    b1f = ((b1_flat - mean_h) * scale + beta.reshape(-1)).astype(jnp.float32)
    W2f = W2.T.astype(jnp.float32)                                       # [C_out, C_mid]
    b2f = b2.reshape(-1).astype(jnp.float32)                             # [C_out]

    # One (8,128) vreg tile per (roi, channel); pad the ROI axis to a multiple of R.
    roi = roi.reshape(K, C_in, SUB, LANE)
    r = _rois_per_block(K, C_in, C_out)
    k_pad = -(-K // r) * r
    if k_pad != K:
        roi = jnp.pad(roi, ((0, k_pad - K), (0, 0), (0, 0), (0, 0)))
    grid = k_pad // r

    smem = pl.BlockSpec(memory_space=pltpu.MemorySpace.SMEM)
    out = pl.pallas_call(
        _mim_kernel,
        out_shape=jax.ShapeDtypeStruct((k_pad, C_out, SUB, LANE), jnp.float32),
        grid=(grid,),
        in_specs=[smem, smem, smem, smem,
                  pl.BlockSpec((r, C_in, SUB, LANE), lambda i: (i, 0, 0, 0))],
        out_specs=pl.BlockSpec((r, C_out, SUB, LANE), lambda i: (i, 0, 0, 0)),
        compiler_params=pltpu.CompilerParams(
            dimension_semantics=("parallel",)),
    )(W1f, b1f, W2f, b2f, roi)

    # Kernel already wrote the torch (k, c, ph, pw) layout: flatten(1) is a free reshape.
    return out.reshape(k_pad, C_out * pp)[:K]


def _reference(x_nchw, ratio_boxs, params, pooled=POOL):
    """Pure-JAX reference mirroring the PyTorch module (unfolded BN, direct stats)."""
    W1, b1, gamma, beta, W2, b2 = params
    K = ratio_boxs.shape[0]
    roi = _roi_align_slab(x_nchw, ratio_boxs, pooled)          # [K, C_in, P, P]
    C_in = roi.shape[1]
    roi_cn = jnp.moveaxis(roi, 1, 0).reshape(C_in, -1)         # [C_in, N]
    h = jnp.dot(W1.T, roi_cn) + b1.reshape(-1, 1)              # [C_mid, N]
    mean = jnp.mean(h, axis=1, keepdims=True)
    var = jnp.mean(jnp.square(h - mean), axis=1, keepdims=True)
    hn = (h - mean) * jax.lax.rsqrt(var + BN_EPS) * gamma.reshape(-1, 1) + beta.reshape(-1, 1)
    hr = jnp.maximum(hn, 0.0)
    o = jnp.dot(W2.T, hr) + b2.reshape(-1, 1)                  # [C_out, N]
    return o.reshape(-1, K, pooled * pooled).transpose(1, 0, 2).reshape(K, -1)


if __name__ == "__main__":
    B, C_in, H, W = 2, 4, 16, 16
    C_mid = C_in // 2          # input_channel // 2
    C_out = 8                  # output_channel

    key = jax.random.PRNGKey(0)
    kx, k1, k2, k3, k4 = jax.random.split(key, 5)

    x = jax.random.normal(kx, (B, C_in, H, W), jnp.float32)
    ratio_boxs = jnp.array([
        [0.0, 1.5, 2.0, 10.0, 12.0],
        [1.0, 0.0, 0.0, 15.0, 15.0],
        [0.0, 3.2, 4.7, 9.9, 14.1],
    ], jnp.float32)

    # Adaptive sampling_ratio = ceil(roi_size / 32) must be 1 for this kernel.
    bw = np.maximum(np.asarray(ratio_boxs[:, 3] - ratio_boxs[:, 1]), 1.0)
    bh = np.maximum(np.asarray(ratio_boxs[:, 4] - ratio_boxs[:, 2]), 1.0)
    assert np.all(np.ceil(bw / POOL) <= 1) and np.all(np.ceil(bh / POOL) <= 1)

    # Deterministic parameter init (conv1x1 weights stored transposed: [C_in, C_out]).
    W1 = 0.2 * jax.random.normal(k1, (C_in, C_mid), jnp.float32)
    b1 = 0.1 * jax.random.normal(k2, (1, C_mid), jnp.float32)
    W2 = 0.2 * jax.random.normal(k3, (C_mid, C_out), jnp.float32)
    b2 = 0.1 * jax.random.normal(k4, (1, C_out), jnp.float32)
    gamma = jnp.ones((1, C_mid), jnp.float32)    # bn1.weight init
    beta = jnp.zeros((1, C_mid), jnp.float32)    # bn1.bias init

    params = (W1, b1, gamma, beta, W2, b2)
    out = mim_forward(x, ratio_boxs, params)
    out = jax.block_until_ready(out)

    assert out.shape == (ratio_boxs.shape[0], C_out * POOL * POOL)
    assert bool(jnp.all(jnp.isfinite(out)))

    ref = jax.block_until_ready(_reference(x, ratio_boxs, params))
    np.testing.assert_allclose(np.asarray(out), np.asarray(ref), rtol=1e-4, atol=1e-4)

    print("KERNEL_OK")
</pallas_src>

<mosaic_0001>
module attributes {stable_mosaic.version = 11 : i64} {
  func.func @_mim_kernel(%arg0: i32, %arg1: memref<2x4xf32, #tpu.memory_space<smem>>, %arg2: memref<2xf32, #tpu.memory_space<smem>>, %arg3: memref<8x2xf32, #tpu.memory_space<smem>>, %arg4: memref<8xf32, #tpu.memory_space<smem>>, %arg5: memref<2x4x8x128xf32, #tpu.memory_space<vmem>>, %arg6: memref<2x8x8x128xf32, #tpu.memory_space<vmem>>) attributes {dimension_semantics = [#tpu.dimension_semantics<parallel>], iteration_bounds = array<i64: 2>, scalar_prefetch = 0 : i64, scratch_operands = 0 : i64, tpu.core_type = #tpu.core_type<tc>, window_params = [{transform_indices = @transform_0, window_bounds = array<i64: 2, 4>}, {transform_indices = @transform_1, window_bounds = array<i64: 2>}, {transform_indices = @transform_2, window_bounds = array<i64: 8, 2>}, {transform_indices = @transform_3, window_bounds = array<i64: 8>}, {transform_indices = @transform_4, window_bounds = array<i64: 2, 4, 8, 128>}, {transform_indices = @transform_5, window_bounds = array<i64: 2, 8, 8, 128>}]} {
    %c0 = arith.constant 0 : index
    %c0_0 = arith.constant 0 : index
    %c0_1 = arith.constant 0 : index
    %c0_2 = arith.constant 0 : index
    %0 = vector.load %arg5[%c0, %c0_0, %c0_1, %c0_2] : memref<2x4x8x128xf32, #tpu.memory_space<vmem>>, vector<2x4x8x128xf32>
    %1 = vector.extract_strided_slice %0 {offsets = [0, 0, 0, 0], sizes = [2, 1, 8, 128], strides = [1, 1, 1, 1]} : vector<2x4x8x128xf32> to vector<2x1x8x128xf32>
    %2 = vector.shape_cast %1 : vector<2x1x8x128xf32> to vector<2x8x128xf32>
    %3 = vector.extract_strided_slice %0 {offsets = [0, 1, 0, 0], sizes = [2, 1, 8, 128], strides = [1, 1, 1, 1]} : vector<2x4x8x128xf32> to vector<2x1x8x128xf32>
    %4 = vector.shape_cast %3 : vector<2x1x8x128xf32> to vector<2x8x128xf32>
    %5 = vector.extract_strided_slice %0 {offsets = [0, 2, 0, 0], sizes = [2, 1, 8, 128], strides = [1, 1, 1, 1]} : vector<2x4x8x128xf32> to vector<2x1x8x128xf32>
    %6 = vector.shape_cast %5 : vector<2x1x8x128xf32> to vector<2x8x128xf32>
    %7 = vector.extract_strided_slice %0 {offsets = [0, 3, 0, 0], sizes = [2, 1, 8, 128], strides = [1, 1, 1, 1]} : vector<2x4x8x128xf32> to vector<2x1x8x128xf32>
    %8 = vector.shape_cast %7 : vector<2x1x8x128xf32> to vector<2x8x128xf32>
    %c0_3 = arith.constant 0 : index
    %c0_4 = arith.constant 0 : index
    %9 = memref.load %arg1[%c0_3, %c0_4] : memref<2x4xf32, #tpu.memory_space<smem>>
    %10 = vector.broadcast %9 : f32 to vector<2x8x128xf32>
    %11 = arith.mulf %2, %10 : vector<2x8x128xf32>
    %c0_5 = arith.constant 0 : index
    %c1 = arith.constant 1 : index
    %12 = memref.load %arg1[%c0_5, %c1] : memref<2x4xf32, #tpu.memory_space<smem>>
    %13 = vector.broadcast %12 : f32 to vector<2x8x128xf32>
    %14 = arith.mulf %4, %13 : vector<2x8x128xf32>
    %15 = arith.addf %11, %14 : vector<2x8x128xf32>
    %c0_6 = arith.constant 0 : index
    %c2 = arith.constant 2 : index
    %16 = memref.load %arg1[%c0_6, %c2] : memref<2x4xf32, #tpu.memory_space<smem>>
    %17 = vector.broadcast %16 : f32 to vector<2x8x128xf32>
    %18 = arith.mulf %6, %17 : vector<2x8x128xf32>
    %19 = arith.addf %15, %18 : vector<2x8x128xf32>
    %c0_7 = arith.constant 0 : index
    %c3 = arith.constant 3 : index
    %20 = memref.load %arg1[%c0_7, %c3] : memref<2x4xf32, #tpu.memory_space<smem>>
    %21 = vector.broadcast %20 : f32 to vector<2x8x128xf32>
    %22 = arith.mulf %8, %21 : vector<2x8x128xf32>
    %23 = arith.addf %19, %22 : vector<2x8x128xf32>
    %c0_8 = arith.constant 0 : index
    %24 = memref.load %arg2[%c0_8] : memref<2xf32, #tpu.memory_space<smem>>
    %25 = vector.broadcast %24 : f32 to vector<2x8x128xf32>
    %26 = arith.addf %23, %25 : vector<2x8x128xf32>
    %cst = arith.constant 0.000000e+00 : f32
    %27 = vector.broadcast %cst : f32 to vector<2x8x128xf32>
    %28 = arith.maximumf %26, %27 : vector<2x8x128xf32>
    %c1_9 = arith.constant 1 : index
    %c0_10 = arith.constant 0 : index
    %29 = memref.load %arg1[%c1_9, %c0_10] : memref<2x4xf32, #tpu.memory_space<smem>>
    %30 = vector.broadcast %29 : f32 to vector<2x8x128xf32>
    %31 = arith.mulf %2, %30 : vector<2x8x128xf32>
    %c1_11 = arith.constant 1 : index
    %c1_12 = arith.constant 1 : index
    %32 = memref.load %arg1[%c1_11, %c1_12] : memref<2x4xf32, #tpu.memory_space<smem>>
    %33 = vector.broadcast %32 : f32 to vector<2x8x128xf32>
    %34 = arith.mulf %4, %33 : vector<2x8x128xf32>
    %35 = arith.addf %31, %34 : vector<2x8x128xf32>
    %c1_13 = arith.constant 1 : index
    %c2_14 = arith.constant 2 : index
    %36 = memref.load %arg1[%c1_13, %c2_14] : memref<2x4xf32, #tpu.memory_space<smem>>
    %37 = vector.broadcast %36 : f32 to vector<2x8x128xf32>
    %38 = arith.mulf %6, %37 : vector<2x8x128xf32>
    %39 = arith.addf %35, %38 : vector<2x8x128xf32>
    %c1_15 = arith.constant 1 : index
    %c3_16 = arith.constant 3 : index
    %40 = memref.load %arg1[%c1_15, %c3_16] : memref<2x4xf32, #tpu.memory_space<smem>>
    %41 = vector.broadcast %40 : f32 to vector<2x8x128xf32>
    %42 = arith.mulf %8, %41 : vector<2x8x128xf32>
    %43 = arith.addf %39, %42 : vector<2x8x128xf32>
    %c1_17 = arith.constant 1 : index
    %44 = memref.load %arg2[%c1_17] : memref<2xf32, #tpu.memory_space<smem>>
    %45 = vector.broadcast %44 : f32 to vector<2x8x128xf32>
    %46 = arith.addf %43, %45 : vector<2x8x128xf32>
    %cst_18 = arith.constant 0.000000e+00 : f32
    %47 = vector.broadcast %cst_18 : f32 to vector<2x8x128xf32>
    %48 = arith.maximumf %46, %47 : vector<2x8x128xf32>
    %c0_19 = arith.constant 0 : index
    %c0_20 = arith.constant 0 : index
    %49 = memref.load %arg3[%c0_19, %c0_20] : memref<8x2xf32, #tpu.memory_space<smem>>
    %50 = vector.broadcast %49 : f32 to vector<2x8x128xf32>
    %51 = arith.mulf %28, %50 : vector<2x8x128xf32>
    %c0_21 = arith.constant 0 : index
    %c1_22 = arith.constant 1 : index
    %52 = memref.load %arg3[%c0_21, %c1_22] : memref<8x2xf32, #tpu.memory_space<smem>>
    %53 = vector.broadcast %52 : f32 to vector<2x8x128xf32>
    %54 = arith.mulf %48, %53 : vector<2x8x128xf32>
    %55 = arith.addf %51, %54 : vector<2x8x128xf32>
    %c0_23 = arith.constant 0 : index
    %56 = memref.load %arg4[%c0_23] : memref<8xf32, #tpu.memory_space<smem>>
    %57 = vector.broadcast %56 : f32 to vector<2x8x128xf32>
    %58 = arith.addf %55, %57 : vector<2x8x128xf32>
    %c1_24 = arith.constant 1 : index
    %c0_25 = arith.constant 0 : index
    %59 = memref.load %arg3[%c1_24, %c0_25] : memref<8x2xf32, #tpu.memory_space<smem>>
    %60 = vector.broadcast %59 : f32 to vector<2x8x128xf32>
    %61 = arith.mulf %28, %60 : vector<2x8x128xf32>
    %c1_26 = arith.constant 1 : index
    %c1_27 = arith.constant 1 : index
    %62 = memref.load %arg3[%c1_26, %c1_27] : memref<8x2xf32, #tpu.memory_space<smem>>
    %63 = vector.broadcast %62 : f32 to vector<2x8x128xf32>
    %64 = arith.mulf %48, %63 : vector<2x8x128xf32>
    %65 = arith.addf %61, %64 : vector<2x8x128xf32>
    %c1_28 = arith.constant 1 : index
    %66 = memref.load %arg4[%c1_28] : memref<8xf32, #tpu.memory_space<smem>>
    %67 = vector.broadcast %66 : f32 to vector<2x8x128xf32>
    %68 = arith.addf %65, %67 : vector<2x8x128xf32>
    %c2_29 = arith.constant 2 : index
    %c0_30 = arith.constant 0 : index
    %69 = memref.load %arg3[%c2_29, %c0_30] : memref<8x2xf32, #tpu.memory_space<smem>>
    %70 = vector.broadcast %69 : f32 to vector<2x8x128xf32>
    %71 = arith.mulf %28, %70 : vector<2x8x128xf32>
    %c2_31 = arith.constant 2 : index
    %c1_32 = arith.constant 1 : index
    %72 = memref.load %arg3[%c2_31, %c1_32] : memref<8x2xf32, #tpu.memory_space<smem>>
    %73 = vector.broadcast %72 : f32 to vector<2x8x128xf32>
    %74 = arith.mulf %48, %73 : vector<2x8x128xf32>
    %75 = arith.addf %71, %74 : vector<2x8x128xf32>
    %c2_33 = arith.constant 2 : index
    %76 = memref.load %arg4[%c2_33] : memref<8xf32, #tpu.memory_space<smem>>
    %77 = vector.broadcast %76 : f32 to vector<2x8x128xf32>
    %78 = arith.addf %75, %77 : vector<2x8x128xf32>
    %c3_34 = arith.constant 3 : index
    %c0_35 = arith.constant 0 : index
    %79 = memref.load %arg3[%c3_34, %c0_35] : memref<8x2xf32, #tpu.memory_space<smem>>
    %80 = vector.broadcast %79 : f32 to vector<2x8x128xf32>
    %81 = arith.mulf %28, %80 : vector<2x8x128xf32>
    %c3_36 = arith.constant 3 : index
    %c1_37 = arith.constant 1 : index
    %82 = memref.load %arg3[%c3_36, %c1_37] : memref<8x2xf32, #tpu.memory_space<smem>>
    %83 = vector.broadcast %82 : f32 to vector<2x8x128xf32>
    %84 = arith.mulf %48, %83 : vector<2x8x128xf32>
    %85 = arith.addf %81, %84 : vector<2x8x128xf32>
    %c3_38 = arith.constant 3 : index
    %86 = memref.load %arg4[%c3_38] : memref<8xf32, #tpu.memory_space<smem>>
    %87 = vector.broadcast %86 : f32 to vector<2x8x128xf32>
    %88 = arith.addf %85, %87 : vector<2x8x128xf32>
    %c4 = arith.constant 4 : index
    %c0_39 = arith.constant 0 : index
    %89 = memref.load %arg3[%c4, %c0_39] : memref<8x2xf32, #tpu.memory_space<smem>>
    %90 = vector.broadcast %89 : f32 to vector<2x8x128xf32>
    %91 = arith.mulf %28, %90 : vector<2x8x128xf32>
    %c4_40 = arith.constant 4 : index
    %c1_41 = arith.constant 1 : index
    %92 = memref.load %arg3[%c4_40, %c1_41] : memref<8x2xf32, #tpu.memory_space<smem>>
    %93 = vector.broadcast %92 : f32 to vector<2x8x128xf32>
    %94 = arith.mulf %48, %93 : vector<2x8x128xf32>
    %95 = arith.addf %91, %94 : vector<2x8x128xf32>
    %c4_42 = arith.constant 4 : index
    %96 = memref.load %arg4[%c4_42] : memref<8xf32, #tpu.memory_space<smem>>
    %97 = vector.broadcast %96 : f32 to vector<2x8x128xf32>
    %98 = arith.addf %95, %97 : vector<2x8x128xf32>
    %c5 = arith.constant 5 : index
    %c0_43 = arith.constant 0 : index
    %99 = memref.load %arg3[%c5, %c0_43] : memref<8x2xf32, #tpu.memory_space<smem>>
    %100 = vector.broadcast %99 : f32 to vector<2x8x128xf32>
    %101 = arith.mulf %28, %100 : vector<2x8x128xf32>
    %c5_44 = arith.constant 5 : index
    %c1_45 = arith.constant 1 : index
    %102 = memref.load %arg3[%c5_44, %c1_45] : memref<8x2xf32, #tpu.memory_space<smem>>
    %103 = vector.broadcast %102 : f32 to vector<2x8x128xf32>
    %104 = arith.mulf %48, %103 : vector<2x8x128xf32>
    %105 = arith.addf %101, %104 : vector<2x8x128xf32>
    %c5_46 = arith.constant 5 : index
    %106 = memref.load %arg4[%c5_46] : memref<8xf32, #tpu.memory_space<smem>>
    %107 = vector.broadcast %106 : f32 to vector<2x8x128xf32>
    %108 = arith.addf %105, %107 : vector<2x8x128xf32>
    %c6 = arith.constant 6 : index
    %c0_47 = arith.constant 0 : index
    %109 = memref.load %arg3[%c6, %c0_47] : memref<8x2xf32, #tpu.memory_space<smem>>
    %110 = vector.broadcast %109 : f32 to vector<2x8x128xf32>
    %111 = arith.mulf %28, %110 : vector<2x8x128xf32>
    %c6_48 = arith.constant 6 : index
    %c1_49 = arith.constant 1 : index
    %112 = memref.load %arg3[%c6_48, %c1_49] : memref<8x2xf32, #tpu.memory_space<smem>>
    %113 = vector.broadcast %112 : f32 to vector<2x8x128xf32>
    %114 = arith.mulf %48, %113 : vector<2x8x128xf32>
    %115 = arith.addf %111, %114 : vector<2x8x128xf32>
    %c6_50 = arith.constant 6 : index
    %116 = memref.load %arg4[%c6_50] : memref<8xf32, #tpu.memory_space<smem>>
    %117 = vector.broadcast %116 : f32 to vector<2x8x128xf32>
    %118 = arith.addf %115, %117 : vector<2x8x128xf32>
    %c7 = arith.constant 7 : index
    %c0_51 = arith.constant 0 : index
    %119 = memref.load %arg3[%c7, %c0_51] : memref<8x2xf32, #tpu.memory_space<smem>>
    %120 = vector.broadcast %119 : f32 to vector<2x8x128xf32>
    %121 = arith.mulf %28, %120 : vector<2x8x128xf32>
    %c7_52 = arith.constant 7 : index
    %c1_53 = arith.constant 1 : index
    %122 = memref.load %arg3[%c7_52, %c1_53] : memref<8x2xf32, #tpu.memory_space<smem>>
    %123 = vector.broadcast %122 : f32 to vector<2x8x128xf32>
    %124 = arith.mulf %48, %123 : vector<2x8x128xf32>
    %125 = arith.addf %121, %124 : vector<2x8x128xf32>
    %c7_54 = arith.constant 7 : index
    %126 = memref.load %arg4[%c7_54] : memref<8xf32, #tpu.memory_space<smem>>
    %127 = vector.broadcast %126 : f32 to vector<2x8x128xf32>
    %128 = arith.addf %125, %127 : vector<2x8x128xf32>
    %129 = vector.shape_cast %58 : vector<2x8x128xf32> to vector<2x1x8x128xf32>
    %130 = vector.shape_cast %68 : vector<2x8x128xf32> to vector<2x1x8x128xf32>
    %131 = vector.shape_cast %78 : vector<2x8x128xf32> to vector<2x1x8x128xf32>
    %132 = vector.shape_cast %88 : vector<2x8x128xf32> to vector<2x1x8x128xf32>
    %133 = vector.shape_cast %98 : vector<2x8x128xf32> to vector<2x1x8x128xf32>
    %134 = vector.shape_cast %108 : vector<2x8x128xf32> to vector<2x1x8x128xf32>
    %135 = vector.shape_cast %118 : vector<2x8x128xf32> to vector<2x1x8x128xf32>
    %136 = vector.shape_cast %128 : vector<2x8x128xf32> to vector<2x1x8x128xf32>
    %137 = tpu.concatenate %129, %130, %131, %132, %133, %134, %135, %136 in 1 : vector<2x1x8x128xf32>, vector<2x1x8x128xf32>, vector<2x1x8x128xf32>, vector<2x1x8x128xf32>, vector<2x1x8x128xf32>, vector<2x1x8x128xf32>, vector<2x1x8x128xf32>, vector<2x1x8x128xf32> -> vector<2x8x8x128xf32>
    %c0_55 = arith.constant 0 : index
    %c0_56 = arith.constant 0 : index
    %c0_57 = arith.constant 0 : index
    %c0_58 = arith.constant 0 : index
    %138 = vector.load %arg6[%c0_55, %c0_56, %c0_57, %c0_58] : memref<2x8x8x128xf32, #tpu.memory_space<vmem>>, vector<2x8x8x128xf32>
    tpu.vector_store %arg6[%c0_55, %c0_56, %c0_57, %c0_58], %137 {strides = array<i32>} : memref<2x8x8x128xf32, #tpu.memory_space<vmem>>, vector<2x8x8x128xf32>,
    return
  }
  func.func @transform_0(%arg0: i32) -> (i32, i32) {
    %c0_i32 = arith.constant 0 : i32
    %c0_i32_0 = arith.constant 0 : i32
    %c0_i32_1 = arith.constant 0 : i32
    return %c0_i32, %c0_i32_0 : i32, i32
  }
  func.func @transform_1(%arg0: i32) -> i32 {
    %c0_i32 = arith.constant 0 : i32
    %c0_i32_0 = arith.constant 0 : i32
    return %c0_i32 : i32
  }
  func.func @transform_2(%arg0: i32) -> (i32, i32) {
    %c0_i32 = arith.constant 0 : i32
    %c0_i32_0 = arith.constant 0 : i32
    %c0_i32_1 = arith.constant 0 : i32
    return %c0_i32, %c0_i32_0 : i32, i32
  }
  func.func @transform_3(%arg0: i32) -> i32 {
    %c0_i32 = arith.constant 0 : i32
    %c0_i32_0 = arith.constant 0 : i32
    return %c0_i32 : i32
  }
  func.func @transform_4(%arg0: i32) -> (i32, i32, i32, i32) {
    %c0_i32 = arith.constant 0 : i32
    %c0_i32_0 = arith.constant 0 : i32
    %c0_i32_1 = arith.constant 0 : i32
    %c0_i32_2 = arith.constant 0 : i32
    return %arg0, %c0_i32, %c0_i32_0, %c0_i32_1 : i32, i32, i32, i32
  }
  func.func @transform_5(%arg0: i32) -> (i32, i32, i32, i32) {
    %c0_i32 = arith.constant 0 : i32
    %c0_i32_0 = arith.constant 0 : i32
    %c0_i32_1 = arith.constant 0 : i32
    %c0_i32_2 = arith.constant 0 : i32
    return %arg0, %c0_i32, %c0_i32_0, %c0_i32_1 : i32, i32, i32, i32
  }
}

</mosaic_0001>

<llo_original>
// kernel: tpu_custom_call.1
$region0: #{tpu_custom_call.1}
  #allocation0 [shape = 'u32[]', space=smem, size = 0x4, offset = 0x4, fixed_abs, tag = 'smem constant byte address 0x4 - core index']
  #allocation1 [shape = 'u32[144,128]{1,0:T(1,128)}', space=vmem, size = 0x12000, scoped, tag = 'internal scratch']
  %s0 = inlined_call_operand.vmem [shape: f32[2,4], index: 0, kind: input, shape index: {}]
  %s1 = inlined_call_operand.vmem [shape: f32[2], index: 1, kind: input, shape index: {}]
  %s2 = inlined_call_operand.vmem [shape: f32[8,2], index: 2, kind: input, shape index: {}]
  %s3 = inlined_call_operand.vmem [shape: f32[8], index: 3, kind: input, shape index: {}]
  %s4 = inlined_call_operand.hbm [shape: f32[4,4,8,128], index: 4, kind: input, shape index: {}]
  %s5 = inlined_call_operand.hbm [shape: f32[4,8,8,128], index: 5, kind: output, shape index: {}]
  %s6 = sld [smem:[#allocation0]]
  $region73: #{tpu_custom_call.1} parent=0
    _
  %s8 = ssub.s32 1, %s6
  %s9 = scalar_select 0, %s8, %s6
  $region1: #{tpu_custom_call.1} parent=0
    #allocation2 [shape = 'u8[1024]{0}', space=smem, size = 0x400, scoped, tag = 'input window, operand 0, single buffered']
    #allocation3 [shape = 's32[2]{0}', space=sflag, size = 0x8, scoped, tag = 'scoped memory for tpu_custom_call.1']
    #allocation4 [shape = 's32[2]{0}', space=sflag, size = 0x8, scoped, tag = 'scoped memory for tpu_custom_call.1']
    #allocation5 [shape = 's32[2]{0}', space=sflag, size = 0x8, scoped, tag = 'scoped memory for tpu_custom_call.1']
    #allocation6 [shape = 'u8[512]{0}', space=smem, size = 0x200, scoped, tag = 'input window, operand 1, single buffered']
    #allocation7 [shape = 's32[1]{0}', space=sflag, size = 0x4, scoped, tag = 'scoped memory for tpu_custom_call.1']
    #allocation8 [shape = 'u8[4096]{0}', space=smem, size = 0x1000, scoped, tag = 'input window, operand 2, single buffered']
    #allocation9 [shape = 'u8[512]{0}', space=smem, size = 0x200, scoped, tag = 'input window, operand 3, single buffered']
    #allocation10 [shape = 's32[1]{0}', space=sflag, size = 0x4, scoped, tag = 'scoped memory for tpu_custom_call.1']
    #allocation11 [shape = 'u8[65536]{0}', space=vmem, size = 0x10000, scoped, tag = 'input window, operand 4']
    #allocation12 [shape = 'u8[131072]{0}', space=vmem, size = 0x20000, scoped, tag = 'output window, operand 0']
    %10 = vsyncpa [#allocation5], 0
    %11 = vsyncpa [#allocation7], 0
    %12 = vsyncpa [#allocation10], 0
    %13 = vsyncpa [#allocation3], 0
    %s14 = scalar_lea.sflag [#allocation3], 1
    %15 = vsyncpa %s14, 0
    %16 = vsyncpa [#allocation4], 0
    %s17 = scalar_lea.sflag [#allocation4], 1
    %18 = vsyncpa %s17, 0
    loop: start=0, step=1, limit=4
    $region2: #{tpu_custom_call.1} parent=1 // loop_pre_header
      _
    $region3: #{tpu_custom_call.1} parent=1 // loop_header
      %s20 = sphi 0, %s24
      %p21 = scmp.ge.s32.totalorder %s20, 4
      %s28 = sphi 0, %s28
      %s30 = sphi 0, %s28
      %s31 = sphi 0, %s30
      %s45 = sphi 0, %s31
      %s49 = sphi 0, %s49
      %s51 = sphi 0, %s49
      %s52 = sphi 0, %s51
      %s66 = sphi 0, %s52
      %s70 = sphi 0, %s70
      %s72 = sphi 0, %s70
      %s73 = sphi 0, %s72
      %s87 = sphi 0, %s73
      %s91 = sphi 0, %s91
      %s93 = sphi 0, %s91
      %s94 = sphi 0, %s93
      %s108 = sphi 0, %s94
      %s114 = sphi 0, %s116
      %s117 = sphi 0, %s114
      %s118 = sphi 0, %s117
      %s134 = sphi 0, %s118
      %s140 = sphi 0, %s142
      %s143 = sphi 0, %s140
      %s144 = sphi 0, %s143
      %s160 = sphi 0, %s144
    $region4: #{tpu_custom_call.1} parent=1 // loop_header_branch
      %23 = sbr.rel (%p21) target = $region8
    $region5: #{tpu_custom_call.1} parent=1 // loop_body
      %s25 = ssub.s32 %s20, 1
      %s26 = ssub.s32 %s20, 2
      %s27 = sadd.s32 %s20, 1
      %s29 = sadd.s32 %s28, 1
      %p32 = scmp.eq.s32.totalorder %s20, 1
      %p33 = scmp.ne.s32.totalorder %s28, %s30
      %p34 = scmp.eq.s32.totalorder %s20, 0
      %p35 = por %p33, %p34
      %p36 = scmp.ne.s32.totalorder %s28, %s30
      %p37 = scmp.eq.s32.totalorder %s25, 1
      %p38 = por %p36, %p37
      %p39 = scmp.ne.s32.totalorder %s30, %s31
      %p40 = scmp.eq.s32.totalorder %s25, 0
      %p41 = por %p39, %p40
      %p42 = scmp.ne.s32.totalorder %s30, %s31
      %p43 = scmp.eq.s32.totalorder %s26, 1
      %p44 = por %p42, %p43
      %p46 = scmp.ne.s32.totalorder %s31, %s45
      %p47 = scmp.eq.s32.totalorder %s26, 0
      %p48 = por %p46, %p47
      %s50 = sadd.s32 %s49, 1
      %p53 = scmp.eq.s32.totalorder %s20, 1
      %p54 = scmp.ne.s32.totalorder %s49, %s51
      %p55 = scmp.eq.s32.totalorder %s20, 0
      %p56 = por %p54, %p55
      %p57 = scmp.ne.s32.totalorder %s49, %s51
      %p58 = scmp.eq.s32.totalorder %s25, 1
      %p59 = por %p57, %p58
      %p60 = scmp.ne.s32.totalorder %s51, %s52
      %p61 = scmp.eq.s32.totalorder %s25, 0
      %p62 = por %p60, %p61
      %p63 = scmp.ne.s32.totalorder %s51, %s52
      %p64 = scmp.eq.s32.totalorder %s26, 1
      %p65 = por %p63, %p64
      %p67 = scmp.ne.s32.totalorder %s52, %s66
      %p68 = scmp.eq.s32.totalorder %s26, 0
      %p69 = por %p67, %p68
      %s71 = sadd.s32 %s70, 1
      %p74 = scmp.eq.s32.totalorder %s20, 1
      %p75 = scmp.ne.s32.totalorder %s70, %s72
      %p76 = scmp.eq.s32.totalorder %s20, 0
      %p77 = por %p75, %p76
      %p78 = scmp.ne.s32.totalorder %s70, %s72
      %p79 = scmp.eq.s32.totalorder %s25, 1
      %p80 = por %p78, %p79
      %p81 = scmp.ne.s32.totalorder %s72, %s73
      %p82 = scmp.eq.s32.totalorder %s25, 0
      %p83 = por %p81, %p82
      %p84 = scmp.ne.s32.totalorder %s72, %s73
      %p85 = scmp.eq.s32.totalorder %s26, 1
      %p86 = por %p84, %p85
      %p88 = scmp.ne.s32.totalorder %s73, %s87
      %p89 = scmp.eq.s32.totalorder %s26, 0
      %p90 = por %p88, %p89
      %s92 = sadd.s32 %s91, 1
      %p95 = scmp.eq.s32.totalorder %s20, 1
      %p96 = scmp.ne.s32.totalorder %s91, %s93
      %p97 = scmp.eq.s32.totalorder %s20, 0
      %p98 = por %p96, %p97
      %p99 = scmp.ne.s32.totalorder %s91, %s93
      %p100 = scmp.eq.s32.totalorder %s25, 1
      %p101 = por %p99, %p100
      %p102 = scmp.ne.s32.totalorder %s93, %s94
      %p103 = scmp.eq.s32.totalorder %s25, 0
      %p104 = por %p102, %p103
      %p105 = scmp.ne.s32.totalorder %s93, %s94
      %p106 = scmp.eq.s32.totalorder %s26, 1
      %p107 = por %p105, %p106
      %p109 = scmp.ne.s32.totalorder %s94, %s108
      %p110 = scmp.eq.s32.totalorder %s26, 0
      %p111 = por %p109, %p110
      %s112 = ssub.s32 %s20, %s27
      %p113 = scmp.eq.s32.totalorder %s112, 0
      %s115 = sadd.s32 %s114, 1
      %s116 = scalar_select %p113, %s114, %s115
      %p119 = pneg %p113
      %p120 = scmp.eq.s32.totalorder %s20, 1
      %p121 = por %p119, %p120
      %p122 = scmp.ne.s32.totalorder %s114, %s117
      %p123 = scmp.eq.s32.totalorder %s20, 0
      %p124 = por %p122, %p123
      %p125 = scmp.ne.s32.totalorder %s114, %s117
      %p126 = scmp.eq.s32.totalorder %s25, 1
      %p127 = por %p125, %p126
      %p128 = scmp.ne.s32.totalorder %s117, %s118
      %p129 = scmp.eq.s32.totalorder %s25, 0
      %p130 = por %p128, %p129
      %p131 = scmp.ne.s32.totalorder %s117, %s118
      %p132 = scmp.eq.s32.totalorder %s26, 1
      %p133 = por %p131, %p132
      %p135 = scmp.ne.s32.totalorder %s118, %s134
      %p136 = scmp.eq.s32.totalorder %s26, 0
      %p137 = por %p135, %p136
      %s138 = ssub.s32 %s20, %s27
      %p139 = scmp.eq.s32.totalorder %s138, 0
      %s141 = sadd.s32 %s140, 1
      %s142 = scalar_select %p139, %s140, %s141
      %p145 = pneg %p139
      %p146 = scmp.eq.s32.totalorder %s20, 1
      %p147 = por %p145, %p146
      %p148 = scmp.ne.s32.totalorder %s140, %s143
      %p149 = scmp.eq.s32.totalorder %s20, 0
      %p150 = por %p148, %p149
      %p151 = scmp.ne.s32.totalorder %s140, %s143
      %p152 = scmp.eq.s32.totalorder %s25, 1
      %p153 = por %p151, %p152
      %p154 = scmp.ne.s32.totalorder %s143, %s144
      %p155 = scmp.eq.s32.totalorder %s25, 0
      %p156 = por %p154, %p155
      %p157 = scmp.ne.s32.totalorder %s143, %s144
      %p158 = scmp.eq.s32.totalorder %s26, 1
      %p159 = por %p157, %p158
      %p161 = scmp.ne.s32.totalorder %s144, %s160
      %p162 = scmp.eq.s32.totalorder %s26, 0
      %p163 = por %p161, %p162
      %p164 = scmp.le.s32.totalorder 1, %s20
      %p165 = scmp.lt.s32.totalorder %s20, 3
      %p166 = pnand %p164, %p165
      %p167 = pneg %p166
      // Predicated region
      $region9: #{tpu_custom_call.1} parent=5 // pred_check
        _
      $region10: #{tpu_custom_call.1} parent=5 // pred_check_branch
        %169 = sbr.rel (%p166) target = $region12
      $region11: #{tpu_custom_call.1} parent=5 // pred_region
        %s170 = ssub.s32 %s20, 1
        // Predicated region
        $region13: #{tpu_custom_call.1} parent=11 // pred_check
          %p171 = pneg %p41
        $region14: #{tpu_custom_call.1} parent=11 // pred_check_branch
          %173 = sbr.rel (%p171) target = $region16
        $region15: #{tpu_custom_call.1} parent=11 // pred_region
          %s175 = ssub.s32 32, 32
          %176 = vsyncadd [#allocation5], %s175
          %s178 = sshll.u32 %s0, 4
          %s179 = int_to_ptr.vmem [resolvable:$true] %s178
          %181 = dma.vmem_to_smem %s179, 32, [#allocation2], [#allocation5]
        $region16: #{tpu_custom_call.1} parent=11 // pred_fallthru
          _
        // Predicated region
        $region17: #{tpu_custom_call.1} parent=11 // pred_check
          %p182 = pneg %p62
        $region18: #{tpu_custom_call.1} parent=11 // pred_check_branch
          %184 = sbr.rel (%p182) target = $region20
        $region19: #{tpu_custom_call.1} parent=11 // pred_region
          %s186 = ssub.s32 16, 16
          %187 = vsyncadd [#allocation7], %s186
          %s189 = sshll.u32 %s1, 4
          %s190 = int_to_ptr.vmem [resolvable:$true] %s189
          %192 = dma.vmem_to_smem %s190, 16, [#allocation6], [#allocation7]
        $region20: #{tpu_custom_call.1} parent=11 // pred_fallthru
          _
        // Predicated region
        $region21: #{tpu_custom_call.1} parent=11 // pred_check
          %p193 = pneg %p83
        $region22: #{tpu_custom_call.1} parent=11 // pred_check_branch
          %195 = sbr.rel (%p193) target = $region24
        $region23: #{tpu_custom_call.1} parent=11 // pred_region
          %s197 = ssub.s32 128, 128
          %198 = vsyncadd [#allocation7], %s197
          %s200 = sshll.u32 %s2, 4
          %s201 = int_to_ptr.vmem [resolvable:$true] %s200
          %203 = dma.vmem_to_smem %s201, 128, [#allocation8], [#allocation7]
        $region24: #{tpu_custom_call.1} parent=11 // pred_fallthru
          _
        // Predicated region
        $region25: #{tpu_custom_call.1} parent=11 // pred_check
          %p204 = pneg %p104
        $region26: #{tpu_custom_call.1} parent=11 // pred_check_branch
          %206 = sbr.rel (%p204) target = $region28
        $region27: #{tpu_custom_call.1} parent=11 // pred_region
          %s208 = ssub.s32 16, 16
          %209 = vsyncadd [#allocation10], %s208
          %s211 = sshll.u32 %s3, 4
          %s212 = int_to_ptr.vmem [resolvable:$true] %s211
          %214 = dma.vmem_to_smem %s212, 16, [#allocation9], [#allocation10]
        $region28: #{tpu_custom_call.1} parent=11 // pred_fallthru
          _
      $region12: #{tpu_custom_call.1} parent=5 // pred_fallthru
        _
      %p215 = scmp.lt.s32.totalorder %s20, 2
      // Predicated region
      $region29: #{tpu_custom_call.1} parent=5 // pred_check
        %p216 = pneg %p215
      $region30: #{tpu_custom_call.1} parent=5 // pred_check_branch
        %218 = sbr.rel (%p216) target = $region32
      $region31: #{tpu_custom_call.1} parent=5 // pred_region
        // Predicated region
        $region33: #{tpu_custom_call.1} parent=31 // pred_check
          %p219 = pneg %p124
        $region34: #{tpu_custom_call.1} parent=31 // pred_check_branch
          %221 = sbr.rel (%p219) target = $region36
        $region35: #{tpu_custom_call.1} parent=31 // pred_region
          %s222 = sand.u32 %s114, 1
          %s223 = scalar_lea.sflag [#allocation3], %s222
          %s224 = sand.u32 %s114, 1
          %s225 = smul.addr %s224, 64
          %s226 = scalar_lea.vmem [#allocation11], %s225
          %s227 = smul.u32 2, %s20
          %s229 = ssub.s32 1024, 1024
          %230 = vsyncadd %s223, %s229
          %s231 = smul.addr %s227, 4
          %s232 = smul.addr %s231, 128
          %s233 = scalar_lea.hbm %s4, %s232
          %s234 = sshll.u32 %s226, 4
          %s235 = int_to_ptr.vmem [resolvable:$true] %s234
          %240 = dma.hbm_to_vmem [thread:$0]  %s233, 1024, %s235, %s223, 128, 128, 8
        $region36: #{tpu_custom_call.1} parent=31 // pred_fallthru
          _
      $region32: #{tpu_custom_call.1} parent=5 // pred_fallthru
        _
      %p241 = scmp.le.s32.totalorder 1, %s20
      %p242 = scmp.lt.s32.totalorder %s20, 3
      %p243 = pnand %p241, %p242
      %p244 = pneg %p243
      // Predicated region
      $region37: #{tpu_custom_call.1} parent=5 // pred_check
        _
      $region38: #{tpu_custom_call.1} parent=5 // pred_check_branch
        %246 = sbr.rel (%p243) target = $region40
      $region39: #{tpu_custom_call.1} parent=5 // pred_region
        %s247 = ssub.s32 %s20, 1
        // Predicated region
        $region41: #{tpu_custom_call.1} parent=39 // pred_check
          %p248 = pneg %p41
        $region42: #{tpu_custom_call.1} parent=39 // pred_check_branch
          %250 = sbr.rel (%p248) target = $region44
        $region43: #{tpu_custom_call.1} parent=39 // pred_region
          %251 = dma.done [#allocation5], 32
        $region44: #{tpu_custom_call.1} parent=39 // pred_fallthru
          _
        // Predicated region
        $region45: #{tpu_custom_call.1} parent=39 // pred_check
          %p252 = pneg %p62
        $region46: #{tpu_custom_call.1} parent=39 // pred_check_branch
          %254 = sbr.rel (%p252) target = $region48
        $region47: #{tpu_custom_call.1} parent=39 // pred_region
          %255 = dma.done [#allocation7], 16
        $region48: #{tpu_custom_call.1} parent=39 // pred_fallthru
          _
        // Predicated region
        $region49: #{tpu_custom_call.1} parent=39 // pred_check
          %p256 = pneg %p83
        $region50: #{tpu_custom_call.1} parent=39 // pred_check_branch
          %258 = sbr.rel (%p256) target = $region52
        $region51: #{tpu_custom_call.1} parent=39 // pred_region
          %259 = dma.done [#allocation7], 128
        $region52: #{tpu_custom_call.1} parent=39 // pred_fallthru
          _
        // Predicated region
        $region53: #{tpu_custom_call.1} parent=39 // pred_check
          %p260 = pneg %p104
        $region54: #{tpu_custom_call.1} parent=39 // pred_check_branch
          %262 = sbr.rel (%p260) target = $region56
        $region55: #{tpu_custom_call.1} parent=39 // pred_region
          %263 = dma.done [#allocation10], 16
        $region56: #{tpu_custom_call.1} parent=39 // pred_fallthru
          _
        %s264 = sand.u32 %s117, 1
        %s265 = scalar_lea.sflag [#allocation3], %s264
        %s266 = sand.u32 %s117, 1
        %s267 = smul.addr %s266, 64
        %s268 = scalar_lea.vmem [#allocation11], %s267
        // Predicated region
        $region57: #{tpu_custom_call.1} parent=39 // pred_check
          %p269 = pneg %p130
        $region58: #{tpu_custom_call.1} parent=39 // pred_check_branch
          %271 = sbr.rel (%p269) target = $region60
        $region59: #{tpu_custom_call.1} parent=39 // pred_region
          %272 = dma.done %s265, 1024
        $region60: #{tpu_custom_call.1} parent=39 // pred_fallthru
          _
        %273 = sfence
        %p274 = pneg %p41
        %p275 = pneg %p38
        %p276 = pneg %p62
        %p277 = pneg %p59
        %p278 = pneg %p83
        %p279 = pneg %p80
        %p280 = pneg %p104
        %p281 = pneg %p101
        %s282 = sand.u32 %s117, 1
        %s283 = scalar_lea.sflag [#allocation3], %s282
        %s284 = sand.u32 %s117, 1
        %s285 = smul.addr %s284, 64
        %s286 = scalar_lea.vmem [#allocation11], %s285
        %p287 = pneg %p130
        %p288 = pneg %p127
        %p289 = pneg %p156
        %p290 = pneg %p153
        %s291 = sand.u32 %s143, 1
        %s292 = scalar_lea.sflag [#allocation4], %s291
        %s293 = sand.u32 %s143, 1
        %s294 = smul.addr %s293, 128
        %s295 = scalar_lea.vmem [#allocation12], %s294
        %s296 = smul.u32 2, %s25
        %s297 = smul.u32 2, %s25
        %v298 = vld [vmem:[%s268] sm:$0xff]
        %v299 = vld [vmem:[%s268 + $0x8] sm:$0xff]
        %v300 = vld [vmem:[%s268 + $0x10] sm:$0xff]
        %v301 = vld [vmem:[%s268 + $0x18] sm:$0xff]
        %v302 = vld [vmem:[%s268 + $0x20] sm:$0xff]
        %v303 = vld [vmem:[%s268 + $0x28] sm:$0xff]
        %v304 = vld [vmem:[%s268 + $0x30] sm:$0xff]
        %v305 = vld [vmem:[%s268 + $0x38] sm:$0xff]
        %s306 = sld [smem:[#allocation2]]
        %v307 = vstv %s306
        %v308 = vmul.f32 %v298, %v307
        %v309 = vmul.f32 %v302, %v307
        %s310 = sld [smem:[#allocation2 + $0x1]]
        %v311 = vstv %s310
        %v312 = vmul.f32 %v299, %v311
        %v313 = vmul.f32 %v303, %v311
        %v314 = vadd.f32 %v308, %v312
        %v315 = vadd.f32 %v309, %v313
        %s316 = sld [smem:[#allocation2 + $0x2]]
        %v317 = vstv %s316
        %v318 = vmul.f32 %v300, %v317
        %v319 = vmul.f32 %v304, %v317
        %v320 = vadd.f32 %v314, %v318
        %v321 = vadd.f32 %v315, %v319
        %s322 = sld [smem:[#allocation2 + $0x3]]
        %v323 = vstv %s322
        %v324 = vmul.f32 %v301, %v323
        %v325 = vmul.f32 %v305, %v323
        %v326 = vadd.f32 %v320, %v324
        %v327 = vadd.f32 %v321, %v325
        %s328 = sld [smem:[#allocation6]]
        %v329 = vstv %s328
        %v330 = vadd.f32 %v326, %v329
        %v331 = vadd.f32 %v327, %v329
        %v332 = vmax.f32 %v330, 0.0
        %v333 = vmax.f32 %v331, 0.0
        %s334 = sld [smem:[#allocation2 + $0x80]]
        %v335 = vstv %s334
        %v336 = vmul.f32 %v298, %v335
        %v337 = vmul.f32 %v302, %v335
        %s338 = sld [smem:[#allocation2 + $0x81]]
        %v339 = vstv %s338
        %v340 = vmul.f32 %v299, %v339
        %v341 = vmul.f32 %v303, %v339
        %v342 = vadd.f32 %v336, %v340
        %v343 = vadd.f32 %v337, %v341
        %s344 = sld [smem:[#allocation2 + $0x82]]
        %v345 = vstv %s344
        %v346 = vmul.f32 %v300, %v345
        %v347 = vmul.f32 %v304, %v345
        %v348 = vadd.f32 %v342, %v346
        %v349 = vadd.f32 %v343, %v347
        %s350 = sld [smem:[#allocation2 + $0x83]]
        %v351 = vstv %s350
        %v352 = vmul.f32 %v301, %v351
        %v353 = vmul.f32 %v305, %v351
        %v354 = vadd.f32 %v348, %v352
        %v355 = vadd.f32 %v349, %v353
        %s356 = sld [smem:[#allocation6 + $0x1]]
        %v357 = vstv %s356
        %v358 = vadd.f32 %v354, %v357
        %v359 = vadd.f32 %v355, %v357
        %v360 = vmax.f32 %v358, 0.0
        %v361 = vmax.f32 %v359, 0.0
        %s362 = sld [smem:[#allocation8]]
        %v363 = vstv %s362
        %v364 = vmul.f32 %v332, %v363
        %v365 = vmul.f32 %v333, %v363
        %s366 = sld [smem:[#allocation8 + $0x1]]
        %v367 = vstv %s366
        %v368 = vmul.f32 %v360, %v367
        %v369 = vmul.f32 %v361, %v367
        %v370 = vadd.f32 %v364, %v368
        %v371 = vadd.f32 %v365, %v369
        %s372 = sld [smem:[#allocation9]]
        %v373 = vstv %s372
        %v374 = vadd.f32 %v370, %v373
        %v375 = vadd.f32 %v371, %v373
        %s376 = sld [smem:[#allocation8 + $0x80]]
        %v377 = vstv %s376
        %v378 = vmul.f32 %v332, %v377
        %v379 = vmul.f32 %v333, %v377
        %s380 = sld [smem:[#allocation8 + $0x81]]
        %v381 = vstv %s380
        %v382 = vmul.f32 %v360, %v381
        %v383 = vmul.f32 %v361, %v381
        %v384 = vadd.f32 %v378, %v382
        %v385 = vadd.f32 %v379, %v383
        %s386 = sld [smem:[#allocation9 + $0x1]]
        %v387 = vstv %s386
        %v388 = vadd.f32 %v384, %v387
        %v389 = vadd.f32 %v385, %v387
        %s390 = sld [smem:[#allocation8 + $0x100]]
        %v391 = vstv %s390
        %v392 = vmul.f32 %v332, %v391
        %v393 = vmul.f32 %v333, %v391
        %s394 = sld [smem:[#allocation8 + $0x101]]
        %v395 = vstv %s394
        %v396 = vmul.f32 %v360, %v395
        %v397 = vmul.f32 %v361, %v395
        %v398 = vadd.f32 %v392, %v396
        %v399 = vadd.f32 %v393, %v397
        %s400 = sld [smem:[#allocation9 + $0x2]]
        %v401 = vstv %s400
        %v402 = vadd.f32 %v398, %v401
        %v403 = vadd.f32 %v399, %v401
        %s404 = sld [smem:[#allocation8 + $0x180]]
        %v405 = vstv %s404
        %v406 = vmul.f32 %v332, %v405
        %v407 = vmul.f32 %v333, %v405
        %s408 = sld [smem:[#allocation8 + $0x181]]
        %v409 = vstv %s408
        %v410 = vmul.f32 %v360, %v409
        %v411 = vmul.f32 %v361, %v409
        %v412 = vadd.f32 %v406, %v410
        %v413 = vadd.f32 %v407, %v411
        %s414 = sld [smem:[#allocation9 + $0x3]]
        %v415 = vstv %s414
        %v416 = vadd.f32 %v412, %v415
        %v417 = vadd.f32 %v413, %v415
        %s418 = sld [smem:[#allocation8 + $0x200]]
        %v419 = vstv %s418
        %v420 = vmul.f32 %v332, %v419
        %v421 = vmul.f32 %v333, %v419
        %s422 = sld [smem:[#allocation8 + $0x201]]
        %v423 = vstv %s422
        %v424 = vmul.f32 %v360, %v423
        %v425 = vmul.f32 %v361, %v423
        %v426 = vadd.f32 %v420, %v424
        %v427 = vadd.f32 %v421, %v425
        %s428 = sld [smem:[#allocation9 + $0x4]]
        %v429 = vstv %s428
        %v430 = vadd.f32 %v426, %v429
        %v431 = vadd.f32 %v427, %v429
        %s432 = sld [smem:[#allocation8 + $0x280]]
        %v433 = vstv %s432
        %v434 = vmul.f32 %v332, %v433
        %v435 = vmul.f32 %v333, %v433
        %s436 = sld [smem:[#allocation8 + $0x281]]
        %v437 = vstv %s436
        %v438 = vmul.f32 %v360, %v437
        %v439 = vmul.f32 %v361, %v437
        %v440 = vadd.f32 %v434, %v438
        %v441 = vadd.f32 %v435, %v439
        %s442 = sld [smem:[#allocation9 + $0x5]]
        %v443 = vstv %s442
        %v444 = vadd.f32 %v440, %v443
        %v445 = vadd.f32 %v441, %v443
        %s446 = sld [smem:[#allocation8 + $0x300]]
        %v447 = vstv %s446
        %v448 = vmul.f32 %v332, %v447
        %v449 = vmul.f32 %v333, %v447
        %s450 = sld [smem:[#allocation8 + $0x301]]
        %v451 = vstv %s450
        %v452 = vmul.f32 %v360, %v451
        %v453 = vmul.f32 %v361, %v451
        %v454 = vadd.f32 %v448, %v452
        %v455 = vadd.f32 %v449, %v453
        %s456 = sld [smem:[#allocation9 + $0x6]]
        %v457 = vstv %s456
        %v458 = vadd.f32 %v454, %v457
        %v459 = vadd.f32 %v455, %v457
        %s460 = sld [smem:[#allocation8 + $0x380]]
        %v461 = vstv %s460
        %v462 = vmul.f32 %v332, %v461
        %v463 = vmul.f32 %v333, %v461
        %s464 = sld [smem:[#allocation8 + $0x381]]
        %v465 = vstv %s464
        %v466 = vmul.f32 %v360, %v465
        %v467 = vmul.f32 %v361, %v465
        %v468 = vadd.f32 %v462, %v466
        %v469 = vadd.f32 %v463, %v467
        %s470 = sld [smem:[#allocation9 + $0x7]]
        %v471 = vstv %s470
        %v472 = vadd.f32 %v468, %v471
        %v473 = vadd.f32 %v469, %v471
        %474 = vst [vmem:[%s295] sm:$0xff] %v374
        %475 = vst [vmem:[%s295 + $0x8] sm:$0xff] %v388
        %476 = vst [vmem:[%s295 + $0x10] sm:$0xff] %v402
        %477 = vst [vmem:[%s295 + $0x18] sm:$0xff] %v416
        %478 = vst [vmem:[%s295 + $0x20] sm:$0xff] %v430
        %479 = vst [vmem:[%s295 + $0x28] sm:$0xff] %v444
        %480 = vst [vmem:[%s295 + $0x30] sm:$0xff] %v458
        %481 = vst [vmem:[%s295 + $0x38] sm:$0xff] %v472
        %482 = vst [vmem:[%s295 + $0x40] sm:$0xff] %v375
        %483 = vst [vmem:[%s295 + $0x48] sm:$0xff] %v389
        %484 = vst [vmem:[%s295 + $0x50] sm:$0xff] %v403
        %485 = vst [vmem:[%s295 + $0x58] sm:$0xff] %v417
        %486 = vst [vmem:[%s295 + $0x60] sm:$0xff] %v431
        %487 = vst [vmem:[%s295 + $0x68] sm:$0xff] %v445
        %488 = vst [vmem:[%s295 + $0x70] sm:$0xff] %v459
        %489 = vst [vmem:[%s295 + $0x78] sm:$0xff] %v473
        %s490 = sand.u32 %s143, 1
        %s491 = scalar_lea.sflag [#allocation4], %s490
        %s492 = sand.u32 %s143, 1
        %s493 = smul.addr %s492, 128
        %s494 = scalar_lea.vmem [#allocation12], %s493
        // Predicated region
        $region61: #{tpu_custom_call.1} parent=39 // pred_check
          %p495 = pneg %p153
        $region62: #{tpu_custom_call.1} parent=39 // pred_check_branch
          %497 = sbr.rel (%p495) target = $region64
        $region63: #{tpu_custom_call.1} parent=39 // pred_region
          %s498 = smul.u32 2, %s25
          %s500 = ssub.s32 2048, 2048
          %501 = vsyncadd %s491, %s500
          %s502 = smul.addr %s498, 8
          %s503 = smul.addr %s502, 128
          %s504 = scalar_lea.hbm %s5, %s503
          %s505 = sshll.u32 %s494, 4
          %s506 = int_to_ptr.vmem [resolvable:$true] %s505
          %511 = dma.vmem_to_hbm [thread:$0]  %s506, 2048, %s504, %s491, 128, 128, 8
        $region64: #{tpu_custom_call.1} parent=39 // pred_fallthru
          _
      $region40: #{tpu_custom_call.1} parent=5 // pred_fallthru
        _
      %p512 = scmp.le.s32.totalorder 2, %s20
      // Predicated region
      $region65: #{tpu_custom_call.1} parent=5 // pred_check
        %p513 = pneg %p512
      $region66: #{tpu_custom_call.1} parent=5 // pred_check_branch
        %515 = sbr.rel (%p513) target = $region68
      $region67: #{tpu_custom_call.1} parent=5 // pred_region
        %s516 = ssub.s32 %s20, 2
        // Predicated region
        $region69: #{tpu_custom_call.1} parent=67 // pred_check
          %p517 = pneg %p159
        $region70: #{tpu_custom_call.1} parent=67 // pred_check_branch
          %519 = sbr.rel (%p517) target = $region72
        $region71: #{tpu_custom_call.1} parent=67 // pred_region
          %s520 = sand.u32 %s144, 1
          %s521 = scalar_lea.sflag [#allocation4], %s520
          %s522 = sand.u32 %s144, 1
          %s523 = smul.addr %s522, 128
          %s524 = scalar_lea.vmem [#allocation12], %s523
          %525 = dma.done %s521, 2048
        $region72: #{tpu_custom_call.1} parent=67 // pred_fallthru
          _
      $region68: #{tpu_custom_call.1} parent=5 // pred_fallthru
        _
    $region6: #{tpu_custom_call.1} parent=1 // loop_footer
      %s24 = sadd.s32 1, %s20
    $region7: #{tpu_custom_call.1} parent=1 // loop_footer_branch
      %19 = sbr.rel target = $region3
    $region8: #{tpu_custom_call.1} parent=1 // loop_exit
      _
    %526 = vsyncpa [#allocation3], 1
    %s527 = scalar_lea.sflag [#allocation3], 1
    %528 = vsyncpa %s527, 1
    %529 = vsyncpa [#allocation4], 1
    %s530 = scalar_lea.sflag [#allocation4], 1
    %531 = vsyncpa %s530, 1
    %532 = vsyncpa [#allocation5], 1
    %s533 = scalar_lea.sflag [#allocation5], 1
    %534 = vsyncpa %s533, 1
    %535 = vsyncpa [#allocation7], 1
    %536 = vsyncpa [#allocation10], 1

</llo_original>
